<compile_context>
chip_gen: v7x
topology: tpu7x:2x2x1
jax: 0.10.0
libtpu: 0.0.40
codegen_flags: <defaults>
</compile_context>

<pallas_src>
import functools

import jax
import jax.numpy as jnp
from jax.experimental import pallas as pl
from jax.experimental.pallas import tpu as pltpu


def _round_up(x, m):
    return ((x + m - 1) // m) * m


def _choose_tiles(n_max):
    """Pick (n_pad, tm, tk) for tiling L.

    Small complexes use one full tile (block == full dims satisfies the (8,128) rule).
    Larger ones use 512x512 tiles: multiple of (8,128), matches the MXU edge on
    v6e/v7x, and the double-buffered working set (bf16: ~0.5 MiB per L buffer) stays
    far below v7x's 64 MiB VMEM as well as the default scoped limits on v5e/v6e.
    """
    if n_max <= 512:
        n_pad = _round_up(n_max, 8)
        return n_pad, n_pad, n_pad
    tm = tk = 512
    return _round_up(n_max, 512), tm, tk


def _scn_fused_kernel(lap_ref, xw_ref, o_ref, acc_ref, *, tk):
    # lap_ref: (1, tm, tk)       bf16 tile of branch b's Laplacian
    # xw_ref : (1, n_pad, c_pad) bf16 full X@W for branch b (resident; re-DMA'd only
    #                            when the branch axis changes)
    # o_ref  : (1, tm, c_pad)    f32 output tile
    # acc_ref: (tm, c_pad)       f32 accumulator scratch
    k = pl.program_id(2)

    @pl.when(k == 0)
    def _():
        acc_ref[...] = jnp.zeros_like(acc_ref)

    start = pl.multiple_of(k * tk, tk)
    xw_tile = xw_ref[0, pl.ds(start, tk), :]
    acc_ref[...] += jnp.dot(lap_ref[0], xw_tile,
                            preferred_element_type=jnp.float32)

    @pl.when(k == pl.num_programs(2) - 1)
    def _():
        # ReLU only on the finished accumulator (never on partial sums).
        o_ref[0] = jnp.maximum(acc_ref[...], 0.0).astype(o_ref.dtype)


def _scn_fused_call(lap_s, xw_s, tm, tk):
    n_branches, n_pad, _ = lap_s.shape
    c_pad = xw_s.shape[-1]
    grid = (n_branches, n_pad // tm, n_pad // tk)

    itemsize = lap_s.dtype.itemsize
    # Double-buffered inputs/outputs + accumulator, with 2x headroom; capped below
    # v7x's 64 MiB physical VMEM.
    need = (2 * (tm * tk * itemsize            # L tile
                 + n_pad * c_pad * itemsize    # resident XW per branch
                 + tm * c_pad * 4)             # output tile
            + tm * c_pad * 4)                  # accumulator
    vmem_limit = int(min(max(2 * need, 16 * 2 ** 20), 48 * 2 ** 20))

    kernel = functools.partial(_scn_fused_kernel, tk=tk)
    return pl.pallas_call(
        kernel,
        out_shape=jax.ShapeDtypeStruct((n_branches, n_pad, c_pad), jnp.float32),
        grid_spec=pltpu.PrefetchScalarGridSpec(
            num_scalar_prefetch=0,
            grid=grid,
            in_specs=[
                # L tile: new block every step.
                pl.BlockSpec((1, tm, tk), lambda b, i, k: (b, i, k)),
                # Full XW for branch b: block index depends only on b -> fetched once
                # per branch, held resident across the whole tile loop.
                pl.BlockSpec((1, n_pad, c_pad), lambda b, i, k: (b, 0, 0)),
            ],
            out_specs=pl.BlockSpec((1, tm, c_pad), lambda b, i, k: (b, i, 0)),
            scratch_shapes=[pltpu.VMEM((tm, c_pad), jnp.float32)],
        ),
        compiler_params=pltpu.CompilerParams(
            dimension_semantics=("parallel", "parallel", "arbitrary"),
            vmem_limit_bytes=vmem_limit,
        ),
    )(lap_s, xw_s)


def scn2_layer_forward(x_0, x_1, x_2, lap_0, lap_1, lap_2, w_0, w_1, w_2,
                       *, compute_dtype=jnp.bfloat16):
    """SCN2Layer.forward: relu(L_k @ X_k @ W_k) for k = 0,1,2 via one fused kernel."""
    xs, laps, ws = (x_0, x_1, x_2), (lap_0, lap_1, lap_2), (w_0, w_1, w_2)
    ns = tuple(x.shape[0] for x in xs)
    cs = tuple(x.shape[1] for x in xs)
    n_pad, tm, tk = _choose_tiles(max(ns))
    c_pad = _round_up(max(max(cs), 128), 128)   # lane-dense output stores

    lap_list, xw_list = [], []
    for x, w, lap, n, c in zip(xs, ws, laps, ns, cs):
        # Feature-mixing matmul hoisted out of the L tile loop (tiny: n x c).
        xw = jnp.dot(x, w, preferred_element_type=jnp.float32)
        xw = jnp.pad(xw, ((0, n_pad - n), (0, c_pad - c)))
        lp = jnp.pad(lap, ((0, n_pad - n), (0, n_pad - n)))
        xw_list.append(xw.astype(compute_dtype))
        lap_list.append(lp.astype(compute_dtype))

    lap_s = jnp.stack(lap_list)   # [3, n_pad, n_pad]  (zero padding is exact: 0*x == 0)
    xw_s = jnp.stack(xw_list)     # [3, n_pad, c_pad]

    out = _scn_fused_call(lap_s, xw_s, tm, tk)   # [3, n_pad, c_pad] f32
    return tuple(out[i, :n, :c] for i, (n, c) in enumerate(zip(ns, cs)))


def _xavier_uniform(key, shape, gain=1.414):
    # Matches torch.nn.init.xavier_uniform_ used by topomodelx Conv.reset_parameters.
    fan_in, fan_out = shape
    a = gain * (6.0 / (fan_in + fan_out)) ** 0.5
    return jax.random.uniform(key, shape, jnp.float32, minval=-a, maxval=a)


if __name__ == "__main__":
    key = jax.random.PRNGKey(0)
    ks = jax.random.split(key, 9)

    # Small synthetic simplicial complex: 16 nodes, 32 edges, 8 faces.
    n_nodes, n_edges, n_faces = 16, 32, 8
    c0, c1, c2 = 4, 8, 16  # in_channels_0/1/2 (Conv is square: out == in)

    x_0 = jax.random.normal(ks[0], (n_nodes, c0), jnp.float32)
    x_1 = jax.random.normal(ks[1], (n_edges, c1), jnp.float32)
    x_2 = jax.random.normal(ks[2], (n_faces, c2), jnp.float32)

    # Dense stand-ins for the (normalized) Hodge Laplacians; symmetrized.
    def sym(k, n):
        m = jax.random.normal(k, (n, n), jnp.float32) * 0.1
        return 0.5 * (m + m.T)

    lap_0 = sym(ks[3], n_nodes)
    lap_1 = sym(ks[4], n_edges)
    lap_2 = sym(ks[5], n_faces)

    w_0 = _xavier_uniform(ks[6], (c0, c0))
    w_1 = _xavier_uniform(ks[7], (c1, c1))
    w_2 = _xavier_uniform(ks[8], (c2, c2))

    fwd = jax.jit(scn2_layer_forward)
    out_0, out_1, out_2 = fwd(x_0, x_1, x_2, lap_0, lap_1, lap_2, w_0, w_1, w_2)
    jax.block_until_ready((out_0, out_1, out_2))

    # Plain-JAX reference with matching bf16 compute (f32 accumulation).
    def ref(lap, x, w):
        xw = jnp.dot(x, w, preferred_element_type=jnp.float32).astype(jnp.bfloat16)
        y = jnp.dot(lap.astype(jnp.bfloat16), xw, preferred_element_type=jnp.float32)
        return jnp.maximum(y, 0.0)

    for o, (lap, x, w) in zip(
            (out_0, out_1, out_2),
            ((lap_0, x_0, w_0), (lap_1, x_1, w_1), (lap_2, x_2, w_2))):
        r = ref(lap, x, w)
        assert o.shape == r.shape
        assert jnp.allclose(o, r, atol=1e-3, rtol=1e-3), float(jnp.max(jnp.abs(o - r)))

    print("KERNEL_OK")
</pallas_src>

<mosaic_0001>
module attributes {stable_mosaic.version = 11 : i64} {
  func.func @_scn_fused_kernel(%arg0: i32, %arg1: i32, %arg2: i32, %arg3: memref<1x32x32xbf16, #tpu.memory_space<vmem>>, %arg4: memref<1x32x128xbf16, #tpu.memory_space<vmem>>, %arg5: memref<1x32x128xf32, #tpu.memory_space<vmem>>, %arg6: memref<32x128xf32, #tpu.memory_space<vmem>>) attributes {dimension_semantics = [#tpu.dimension_semantics<parallel>, #tpu.dimension_semantics<parallel>, #tpu.dimension_semantics<arbitrary>], iteration_bounds = array<i64: 3, 1, 1>, scalar_prefetch = 0 : i64, scratch_operands = 1 : i64, tpu.core_type = #tpu.core_type<tc>, window_params = [{transform_indices = @transform_0, window_bounds = array<i64: 1, 32, 32>}, {transform_indices = @transform_1, window_bounds = array<i64: 1, 32, 128>}, {transform_indices = @transform_2, window_bounds = array<i64: 1, 32, 128>}]} {
    %c0_i32 = arith.constant 0 : i32
    %0 = arith.cmpi eq, %arg2, %c0_i32 : i32
    %1 = arith.extui %0 : i1 to i32
    %c0_i32_0 = arith.constant 0 : i32
    %2 = arith.cmpi ne, %1, %c0_i32_0 : i32
    scf.if %2 {
      %cst_11 = arith.constant 0.000000e+00 : f32
      %17 = vector.broadcast %cst_11 : f32 to vector<32x128xf32>
      %c0_12 = arith.constant 0 : index
      %c0_13 = arith.constant 0 : index
      %18 = vector.load %arg6[%c0_12, %c0_13] : memref<32x128xf32, #tpu.memory_space<vmem>>, vector<32x128xf32>
      tpu.vector_store %arg6[%c0_12, %c0_13], %17 {strides = array<i32>} : memref<32x128xf32, #tpu.memory_space<vmem>>, vector<32x128xf32>,
    } else {
    }
    %c32_i32 = arith.constant 32 : i32
    %3 = arith.muli %arg2, %c32_i32 : i32
    %4 = tpu.assume_multiple %3, 32 : i32
    %c0 = arith.constant 0 : index
    %5 = arith.index_cast %4 : i32 to index
    %c0_1 = arith.constant 0 : index
    %6 = vector.load %arg4[%c0, %5, %c0_1] : memref<1x32x128xbf16, #tpu.memory_space<vmem>>, vector<1x32x128xbf16>
    %7 = vector.shape_cast %6 : vector<1x32x128xbf16> to vector<32x128xbf16>
    %c0_2 = arith.constant 0 : index
    %c0_3 = arith.constant 0 : index
    %8 = vector.load %arg6[%c0_2, %c0_3] : memref<32x128xf32, #tpu.memory_space<vmem>>, vector<32x128xf32>
    %c0_4 = arith.constant 0 : index
    %c0_5 = arith.constant 0 : index
    %c0_6 = arith.constant 0 : index
    %9 = vector.load %arg3[%c0_4, %c0_5, %c0_6] : memref<1x32x32xbf16, #tpu.memory_space<vmem>>, vector<1x32x32xbf16>
    %10 = vector.shape_cast %9 : vector<1x32x32xbf16> to vector<32x32xbf16>
    %cst = arith.constant dense<0.000000e+00> : vector<32x128xf32>
    %11 = tpu.matmul %10, %7, %cst {dimension_numbers = #tpu.dot_dimension_numbers<[1], [0], [0], [1], [0, 0, 1, 1], [], []>} : vector<32x32xbf16>, vector<32x128xbf16>, vector<32x128xf32> -> vector<32x128xf32>
    %12 = arith.addf %8, %11 : vector<32x128xf32>
    %c0_7 = arith.constant 0 : index
    %c0_8 = arith.constant 0 : index
    %13 = vector.load %arg6[%c0_7, %c0_8] : memref<32x128xf32, #tpu.memory_space<vmem>>, vector<32x128xf32>
    tpu.vector_store %arg6[%c0_7, %c0_8], %12 {strides = array<i32>} : memref<32x128xf32, #tpu.memory_space<vmem>>, vector<32x128xf32>,
    %c0_i32_9 = arith.constant 0 : i32
    %14 = arith.cmpi eq, %arg2, %c0_i32_9 : i32
    %15 = arith.extui %14 : i1 to i32
    %c0_i32_10 = arith.constant 0 : i32
    %16 = arith.cmpi ne, %15, %c0_i32_10 : i32
    scf.if %16 {
      %c0_11 = arith.constant 0 : index
      %c0_12 = arith.constant 0 : index
      %17 = vector.load %arg6[%c0_11, %c0_12] : memref<32x128xf32, #tpu.memory_space<vmem>>, vector<32x128xf32>
      %cst_13 = arith.constant 0.000000e+00 : f32
      %18 = vector.broadcast %cst_13 : f32 to vector<32x128xf32>
      %19 = arith.maximumf %17, %18 : vector<32x128xf32>
      %c0_14 = arith.constant 0 : index
      %c0_15 = arith.constant 0 : index
      %c0_16 = arith.constant 0 : index
      %20 = vector.load %arg5[%c0_14, %c0_15, %c0_16] : memref<1x32x128xf32, #tpu.memory_space<vmem>>, vector<1x32x128xf32>
      %21 = vector.shape_cast %20 : vector<1x32x128xf32> to vector<32x128xf32>
      %22 = vector.shape_cast %19 : vector<32x128xf32> to vector<1x32x128xf32>
      tpu.vector_store %arg5[%c0_14, %c0_15, %c0_16], %22 {strides = array<i32>} : memref<1x32x128xf32, #tpu.memory_space<vmem>>, vector<1x32x128xf32>,
    } else {
    }
    return
  }
  func.func @transform_0(%arg0: i32, %arg1: i32, %arg2: i32) -> (i32, i32, i32) {
    %c0_i32 = arith.constant 0 : i32
    return %arg0, %arg1, %arg2 : i32, i32, i32
  }
  func.func @transform_1(%arg0: i32, %arg1: i32, %arg2: i32) -> (i32, i32, i32) {
    %c0_i32 = arith.constant 0 : i32
    %c0_i32_0 = arith.constant 0 : i32
    %c0_i32_1 = arith.constant 0 : i32
    return %arg0, %c0_i32, %c0_i32_0 : i32, i32, i32
  }
  func.func @transform_2(%arg0: i32, %arg1: i32, %arg2: i32) -> (i32, i32, i32) {
    %c0_i32 = arith.constant 0 : i32
    %c0_i32_0 = arith.constant 0 : i32
    return %arg0, %arg1, %c0_i32 : i32, i32, i32
  }
}

</mosaic_0001>

<llo_original>
// kernel: scn2_layer_forward.1
$region0: #{scn2_layer_forward.1}
  #allocation0 [shape = 'u32[]', space=smem, size = 0x4, offset = 0x4, fixed_abs, tag = 'smem constant byte address 0x4 - core index']
  #allocation1 [shape = 'u32[144,128]{1,0:T(1,128)}', space=vmem, size = 0x12000, scoped, tag = 'internal scratch']
  #allocation2 [shape = 'f32[32,128]{1,0:T(8,128)}', space=vmem, size = 0x4000, scoped, tag = 'scratch operand']
  %s0 = inlined_call_operand.vmem [shape: bf16[3,32,32], index: 0, kind: input, shape index: {}]
  %s1 = inlined_call_operand.vmem [shape: bf16[3,32,128], index: 1, kind: input, shape index: {}]
  %s2 = inlined_call_operand.vmem [shape: f32[3,32,128], index: 2, kind: output, shape index: {}]
  %s3 = sld [smem:[#allocation0]]
  $region49: #{scn2_layer_forward.1} parent=0
    _
  %s5 = ssub.s32 1, %s3
  %s6 = scalar_select 0, %s5, %s3
  loop: start=0, step=1, limit=5
  $region2: #{scn2_layer_forward.1} parent=0 // loop_pre_header
    _
  $region3: #{scn2_layer_forward.1} parent=0 // loop_header
    %s8 = sphi 0, %s12
    %p9 = scmp.ge.s32.totalorder %s8, 5
    %s15 = sphi 0, %s34
    %s16 = sphi 0, %s30
    %s17 = sphi 0, %s26
    %s18 = sphi 0, %s15
    %s19 = sphi 0, %s16
    %s20 = sphi 0, %s17
    %s21 = sphi 0, %s18
    %s22 = sphi 0, %s19
    %s23 = sphi 0, %s20
    %s41 = sphi 0, %s43
    %s44 = sphi 0, %s41
    %s45 = sphi 0, %s44
    %s61 = sphi 0, %s45
    %s67 = sphi 0, %s69
    %s70 = sphi 0, %s67
    %s71 = sphi 0, %s70
    %s87 = sphi 0, %s71
    %s95 = sphi 0, %s97
    %s98 = sphi 0, %s95
    %s99 = sphi 0, %s98
    %s115 = sphi 0, %s99
  $region4: #{scn2_layer_forward.1} parent=0 // loop_header_branch
    %11 = sbr.rel (%p9) target = $region8
  $region5: #{scn2_layer_forward.1} parent=0 // loop_body
    %s13 = ssub.s32 %s8, 1
    %s14 = ssub.s32 %s8, 2
    %s24 = sadd.s32 1, %s17
    %p25 = scmp.ge.s32.totalorder %s24, 1
    %s26 = scalar_select %p25, 0, %s24
    %s27 = sadd.s32 1, %s16
    %s28 = scalar_select %p25, %s27, %s16
    %p29 = scmp.ge.s32.totalorder %s28, 1
    %s30 = scalar_select %p29, 0, %s28
    %s31 = sadd.s32 1, %s15
    %s32 = scalar_select %p29, %s31, %s15
    %p33 = scmp.ge.s32.totalorder %s32, 3
    %s34 = scalar_select %p33, 0, %s32
    %s35 = ssub.s32 %s15, %s34
    %s36 = ssub.s32 %s16, %s30
    %s37 = sor.u32 %s35, %s36
    %s38 = ssub.s32 %s17, %s26
    %s39 = sor.u32 %s37, %s38
    %p40 = scmp.eq.s32.totalorder %s39, 0
    %s42 = sadd.s32 %s41, 1
    %s43 = scalar_select %p40, %s41, %s42
    %p46 = pneg %p40
    %p47 = scmp.eq.s32.totalorder %s8, 2
    %p48 = por %p46, %p47
    %p49 = scmp.ne.s32.totalorder %s41, %s44
    %p50 = scmp.eq.s32.totalorder %s8, 0
    %p51 = por %p49, %p50
    %p52 = scmp.ne.s32.totalorder %s41, %s44
    %p53 = scmp.eq.s32.totalorder %s13, 2
    %p54 = por %p52, %p53
    %p55 = scmp.ne.s32.totalorder %s44, %s45
    %p56 = scmp.eq.s32.totalorder %s13, 0
    %p57 = por %p55, %p56
    %p58 = scmp.ne.s32.totalorder %s44, %s45
    %p59 = scmp.eq.s32.totalorder %s14, 2
    %p60 = por %p58, %p59
    %p62 = scmp.ne.s32.totalorder %s45, %s61
    %p63 = scmp.eq.s32.totalorder %s14, 0
    %p64 = por %p62, %p63
    %s65 = ssub.s32 %s15, %s34
    %p66 = scmp.eq.s32.totalorder %s65, 0
    %s68 = sadd.s32 %s67, 1
    %s69 = scalar_select %p66, %s67, %s68
    %p72 = pneg %p66
    %p73 = scmp.eq.s32.totalorder %s8, 2
    %p74 = por %p72, %p73
    %p75 = scmp.ne.s32.totalorder %s67, %s70
    %p76 = scmp.eq.s32.totalorder %s8, 0
    %p77 = por %p75, %p76
    %p78 = scmp.ne.s32.totalorder %s67, %s70
    %p79 = scmp.eq.s32.totalorder %s13, 2
    %p80 = por %p78, %p79
    %p81 = scmp.ne.s32.totalorder %s70, %s71
    %p82 = scmp.eq.s32.totalorder %s13, 0
    %p83 = por %p81, %p82
    %p84 = scmp.ne.s32.totalorder %s70, %s71
    %p85 = scmp.eq.s32.totalorder %s14, 2
    %p86 = por %p84, %p85
    %p88 = scmp.ne.s32.totalorder %s71, %s87
    %p89 = scmp.eq.s32.totalorder %s14, 0
    %p90 = por %p88, %p89
    %s91 = ssub.s32 %s15, %s34
    %s92 = ssub.s32 %s16, %s30
    %s93 = sor.u32 %s91, %s92
    %p94 = scmp.eq.s32.totalorder %s93, 0
    %s96 = sadd.s32 %s95, 1
    %s97 = scalar_select %p94, %s95, %s96
    %p100 = pneg %p94
    %p101 = scmp.eq.s32.totalorder %s8, 2
    %p102 = por %p100, %p101
    %p103 = scmp.ne.s32.totalorder %s95, %s98
    %p104 = scmp.eq.s32.totalorder %s8, 0
    %p105 = por %p103, %p104
    %p106 = scmp.ne.s32.totalorder %s95, %s98
    %p107 = scmp.eq.s32.totalorder %s13, 2
    %p108 = por %p106, %p107
    %p109 = scmp.ne.s32.totalorder %s98, %s99
    %p110 = scmp.eq.s32.totalorder %s13, 0
    %p111 = por %p109, %p110
    %p112 = scmp.ne.s32.totalorder %s98, %s99
    %p113 = scmp.eq.s32.totalorder %s14, 2
    %p114 = por %p112, %p113
    %p116 = scmp.ne.s32.totalorder %s99, %s115
    %p117 = scmp.eq.s32.totalorder %s14, 0
    %p118 = por %p116, %p117
    %p119 = scmp.le.s32.totalorder 1, %s8
    %p120 = scmp.lt.s32.totalorder %s8, 4
    %p121 = pnand %p119, %p120
    %p122 = pneg %p121
    // Predicated region
    $region9: #{scn2_layer_forward.1} parent=5 // pred_check
      _
    $region10: #{scn2_layer_forward.1} parent=5 // pred_check_branch
      %124 = sbr.rel (%p121) target = $region12
    $region11: #{scn2_layer_forward.1} parent=5 // pred_region
      %s125 = ssub.s32 %s8, 1
    $region12: #{scn2_layer_forward.1} parent=5 // pred_fallthru
      _
    %p126 = scmp.lt.s32.totalorder %s8, 3
    // Predicated region
    $region13: #{scn2_layer_forward.1} parent=5 // pred_check
      %p127 = pneg %p126
    $region14: #{scn2_layer_forward.1} parent=5 // pred_check_branch
      %129 = sbr.rel (%p127) target = $region16
    $region15: #{scn2_layer_forward.1} parent=5 // pred_region
      // Predicated region
      $region17: #{scn2_layer_forward.1} parent=15 // pred_check
        %p130 = pneg %p51
      $region18: #{scn2_layer_forward.1} parent=15 // pred_check_branch
        %132 = sbr.rel (%p130) target = $region20
      $region19: #{scn2_layer_forward.1} parent=15 // pred_region
        %s133 = smul.u32 4, %s16
        %p134 = scmp.lt.s32.totalorder %s15, 2
        %s135 = scalar_select %p134, %s15, 2
        %p136 = scmp.lt.s32.totalorder %s133, 3
        %s137 = scalar_select %p136, %s133, 3
        %p138 = scmp.lt.s32.totalorder %s17, 0
        %s139 = scalar_select %p138, %s17, 0
        %s140 = sadd.s32 %s139, %s137
        %s141 = smul.addr %s135, 4
        %s142 = sadd.s32 %s140, %s141
        %s143 = smul.addr %s142, 4
        %s144 = scalar_lea.vmem %s0, %s143
        %s145 = smul.u32 4, %s16
      $region20: #{scn2_layer_forward.1} parent=15 // pred_fallthru
        _
      // Predicated region
      $region21: #{scn2_layer_forward.1} parent=15 // pred_check
        %p146 = pneg %p77
      $region22: #{scn2_layer_forward.1} parent=15 // pred_check_branch
        %148 = sbr.rel (%p146) target = $region24
      $region23: #{scn2_layer_forward.1} parent=15 // pred_region
        %p149 = scmp.lt.s32.totalorder %s15, 2
        %s150 = scalar_select %p149, %s15, 2
        %s151 = smul.addr %s150, 4
        %s152 = smul.addr %s151, 4
        %s153 = scalar_lea.vmem %s1, %s152
      $region24: #{scn2_layer_forward.1} parent=15 // pred_fallthru
        _
    $region16: #{scn2_layer_forward.1} parent=5 // pred_fallthru
      _
    %p154 = scmp.le.s32.totalorder 1, %s8
    %p155 = scmp.lt.s32.totalorder %s8, 4
    %p156 = pnand %p154, %p155
    %p157 = pneg %p156
    // Predicated region
    $region25: #{scn2_layer_forward.1} parent=5 // pred_check
      _
    $region26: #{scn2_layer_forward.1} parent=5 // pred_check_branch
      %159 = sbr.rel (%p156) target = $region28
    $region27: #{scn2_layer_forward.1} parent=5 // pred_region
      %s160 = ssub.s32 %s8, 1
      %s161 = smul.u32 4, %s19
      %p162 = scmp.lt.s32.totalorder %s18, 2
      %s163 = scalar_select %p162, %s18, 2
      %p164 = scmp.lt.s32.totalorder %s161, 3
      %s165 = scalar_select %p164, %s161, 3
      %p166 = scmp.lt.s32.totalorder %s20, 0
      %s167 = scalar_select %p166, %s20, 0
      %s168 = sadd.s32 %s167, %s165
      %s169 = smul.addr %s163, 4
      %s170 = sadd.s32 %s168, %s169
      %s171 = smul.addr %s170, 4
      %s172 = scalar_lea.vmem %s0, %s171
      %p173 = pneg %p57
      %p174 = pneg %p54
      %p175 = scmp.lt.s32.totalorder %s18, 2
      %s176 = scalar_select %p175, %s18, 2
      %s177 = smul.addr %s176, 4
      %s178 = smul.addr %s177, 4
      %s179 = scalar_lea.vmem %s1, %s178
      %p180 = pneg %p83
      %p181 = pneg %p80
      %p182 = pneg %p111
      %p183 = pneg %p108
      %s184 = smul.u32 4, %s19
      %p185 = scmp.lt.s32.totalorder %s18, 2
      %s186 = scalar_select %p185, %s18, 2
      %p187 = scmp.lt.s32.totalorder %s184, 3
      %s188 = scalar_select %p187, %s184, 3
      %s189 = smul.addr %s186, 4
      %s190 = sadd.s32 %s188, %s189
      %s191 = smul.addr %s190, 8
      %s192 = scalar_lea.vmem %s2, %s191
      %s193 = smul.u32 4, %s19
      %p194 = scmp.lt.s32.totalorder %s18, 2
      %s195 = scalar_select %p194, %s18, 2
      %p196 = scmp.lt.s32.totalorder %s193, 3
      %s197 = scalar_select %p196, %s193, 3
      %p198 = scmp.lt.s32.totalorder %s20, 0
      %s199 = scalar_select %p198, %s20, 0
      %s200 = sadd.s32 %s199, %s197
      %s201 = smul.addr %s195, 4
      %s202 = sadd.s32 %s200, %s201
      %s203 = smul.addr %s202, 4
      %s204 = scalar_lea.vmem %s0, %s203
      %s205 = smul.u32 4, %s19
      %p206 = scmp.lt.s32.totalorder %s18, 2
      %s207 = scalar_select %p206, %s18, 2
      %s208 = smul.addr %s207, 4
      %s209 = smul.addr %s208, 4
      %s210 = scalar_lea.vmem %s1, %s209
      %s211 = smul.u32 4, %s19
      %p212 = scmp.lt.s32.totalorder %s18, 2
      %s213 = scalar_select %p212, %s18, 2
      %p214 = scmp.lt.s32.totalorder %s211, 3
      %s215 = scalar_select %p214, %s211, 3
      %s216 = smul.addr %s213, 4
      %s217 = sadd.s32 %s215, %s216
      %s218 = smul.addr %s217, 8
      %s219 = scalar_lea.vmem %s2, %s218
      %s220 = smul.u32 4, %s19
      %p222 = scmp.eq.s32.totalorder %s20, 0
      // Predicated region
      $region29: #{scn2_layer_forward.1} parent=27 // pred_check
        %p223 = pneg %p222
      $region30: #{scn2_layer_forward.1} parent=27 // pred_check_branch
        %225 = sbr.rel (%p223) target = $region32
      $region31: #{scn2_layer_forward.1} parent=27 // pred_region
        %226 = vst [vmem:[#allocation2] sm:$0xff] 0.0
        %227 = vst [vmem:[#allocation2 + $0x8] sm:$0xff] 0.0
        %228 = vst [vmem:[#allocation2 + $0x10] sm:$0xff] 0.0
        %229 = vst [vmem:[#allocation2 + $0x18] sm:$0xff] 0.0
      $region32: #{scn2_layer_forward.1} parent=27 // pred_fallthru
        _
      %s230 = smul.u32 %s20, 32
      %s231 = sshra.s32 %s230, 3
      %s232 = sand.u32 %s230, 7
      %s233 = smul.addr %s231, 4
      %s234 = scalar_lea.vmem %s210, %s233
      %v235 = vld [vmem:[%s234] sm:$0xf]
      %v236 = vld [vmem:[%s234 + $0x4] sm:$0xf]
      %v237 = vld [vmem:[%s234 + $0x8] sm:$0xf]
      %v238 = vld [vmem:[%s234 + $0xc] sm:$0xf]
      %v239 = vld [vmem:[#allocation2] sm:$0xff]
      %v240 = vld [vmem:[#allocation2 + $0x8] sm:$0xff]
      %v241 = vld [vmem:[#allocation2 + $0x10] sm:$0xff]
      %v242 = vld [vmem:[#allocation2 + $0x18] sm:$0xff]
      %v243 = vld [vmem:[%s204] sm:$0xf]
      %v244 = vld [vmem:[%s204 + $0x4] sm:$0xf]
      %v245 = vld [vmem:[%s204 + $0x8] sm:$0xf]
      %v246 = vld [vmem:[%s204 + $0xc] sm:$0xf]
      %v251 = vunpack.c.l.b16 %v243
      %v252 = vunpack.c.l.b16 %v244
      %v253 = vunpack.c.l.b16 %v245
      %v254 = vunpack.c.l.b16 %v246
      %v255 = vpack.c.b16 %v252, %v251
      %v256 = vpack.c.b16 %v254, %v253
      %v261 = vunpack.c.l.b16 %v235
      %v262 = vunpack.c.l.b16 %v236
      %v263 = vunpack.c.l.b16 %v237
      %v264 = vunpack.c.l.b16 %v238
      %v265 = vpack.c.b16 %v262, %v261
      %v266 = vpack.c.b16 %v264, %v263
      %vm269 = vcmask 261120
      %v271 = vsel %vm269, %v255, 0
      %v274 = vsel %vm269, %v256, 0
      %276 = vmatprep.subr.bf16.mxu0 0
      %277 = vmatpush1.bf16.msra.mxu0 %v265
      %278 = vmatprep.subr.bf16.mxu0 0
      %279 = vmatpush1.bf16.msra.mxu0 %v266
      %280 = vmatprep.subr.bf16.mxu0 0
      %281 = vmatpush1.bf16.msra.mxu0 0
      %282 = vmatprep.subr.bf16.mxu0 0
      %283 = vmatpush1.bf16.msra.mxu0 0
      %284 = vmatprep.subr.bf16.mxu0 0
      %285 = vmatpush1.bf16.msra.mxu0 0
      %286 = vmatprep.subr.bf16.mxu0 0
      %287 = vmatpush1.bf16.msra.mxu0 0
      %288 = vmatprep.subr.bf16.mxu0 0
      %289 = vmatpush1.bf16.msra.mxu0 0
      %290 = vmatprep.subr.bf16.mxu0 0
      %291 = vmatpush1.bf16.msra.mxu0 0
      %292 = vmatprep.subr.bf16.mxu0 0
      %293 = vmatpush1.bf16.msra.mxu0 0
      %294 = vmatprep.subr.bf16.mxu0 0
      %295 = vmatpush1.bf16.msra.mxu0 0
      %296 = vmatprep.subr.bf16.mxu0 0
      %297 = vmatpush1.bf16.msra.mxu0 0
      %298 = vmatprep.subr.bf16.mxu0 0
      %299 = vmatpush1.bf16.msra.mxu0 0
      %300 = vmatprep.subr.bf16.mxu0 0
      %301 = vmatpush1.bf16.msra.mxu0 0
      %302 = vmatprep.subr.bf16.mxu0 0
      %303 = vmatpush1.bf16.msra.mxu0 0
      %304 = vmatprep.subr.bf16.mxu0 0
      %305 = vmatpush1.bf16.msra.mxu0 0
      %306 = vmatprep.subr.bf16.mxu0 0
      %307 = vmatpush1.bf16.msra.mxu0 0
      %308 = vmatprep.mubr.bf16.mxu0 0
      %309 = vmatmul.mubr.bf16.gmra.mrb[0].mxu0 %v271
      %v310 = vpop.f32.mrb[0].mxu0
      %v311 = vadd.f32 0.0, %v310
      %v312 = vpop.f32.mrb[0].mxu0
      %v313 = vpop.f32.mrb[0].mxu0
      %v314 = vadd.f32 0.0, %v313
      %v315 = vpop.f32.mrb[0].mxu0
      %316 = vmatprep.mubr.bf16.mxu0 0
      %317 = vmatmul.mubr.bf16.gmra.mrb[0].mxu0 %v274
      %v318 = vpop.f32.mrb[0].mxu0
      %v319 = vadd.f32 0.0, %v318
      %v320 = vpop.f32.mrb[0].mxu0
      %v321 = vpop.f32.mrb[0].mxu0
      %v322 = vadd.f32 0.0, %v321
      %v323 = vpop.f32.mrb[0].mxu0
      %324 = vdwg.mxu0
      %v325 = vadd.f32 %v239, %v311
      %v326 = vadd.f32 %v240, %v314
      %v327 = vadd.f32 %v241, %v319
      %v328 = vadd.f32 %v242, %v322
      %329 = vst [vmem:[#allocation2] sm:$0xff] %v325
      %330 = vst [vmem:[#allocation2 + $0x8] sm:$0xff] %v326
      %331 = vst [vmem:[#allocation2 + $0x10] sm:$0xff] %v327
      %332 = vst [vmem:[#allocation2 + $0x18] sm:$0xff] %v328
      // Predicated region
      $region33: #{scn2_layer_forward.1} parent=27 // pred_check
        %p333 = pneg %p222
      $region34: #{scn2_layer_forward.1} parent=27 // pred_check_branch
        %335 = sbr.rel (%p333) target = $region36
      $region35: #{scn2_layer_forward.1} parent=27 // pred_region
        %v336 = vld [vmem:[#allocation2] sm:$0xff]
        %v337 = vld [vmem:[#allocation2 + $0x8] sm:$0xff]
        %v338 = vld [vmem:[#allocation2 + $0x10] sm:$0xff]
        %v339 = vld [vmem:[#allocation2 + $0x18] sm:$0xff]
        %v340 = vmax.f32 %v336, 0.0
        %v341 = vmax.f32 %v337, 0.0
        %v342 = vmax.f32 %v338, 0.0
        %v343 = vmax.f32 %v339, 0.0
        %344 = vst [vmem:[%s219] sm:$0xff] %v340
        %345 = vst [vmem:[%s219 + $0x8] sm:$0xff] %v341
        %346 = vst [vmem:[%s219 + $0x10] sm:$0xff] %v342
        %347 = vst [vmem:[%s219 + $0x18] sm:$0xff] %v343
      $region36: #{scn2_layer_forward.1} parent=27 // pred_fallthru
        _
      %s348 = smul.u32 4, %s19
      %p349 = scmp.lt.s32.totalorder %s18, 2
      %s350 = scalar_select %p349, %s18, 2
      %p351 = scmp.lt.s32.totalorder %s348, 3
      %s352 = scalar_select %p351, %s348, 3
      %s353 = smul.addr %s350, 4
      %s354 = sadd.s32 %s352, %s353
      %s355 = smul.addr %s354, 8
      %s356 = scalar_lea.vmem %s2, %s355
      // Predicated region
      $region37: #{scn2_layer_forward.1} parent=27 // pred_check
        %p357 = pneg %p108
      $region38: #{scn2_layer_forward.1} parent=27 // pred_check_branch
        %359 = sbr.rel (%p357) target = $region40
      $region39: #{scn2_layer_forward.1} parent=27 // pred_region
        %s360 = smul.u32 4, %s19
      $region40: #{scn2_layer_forward.1} parent=27 // pred_fallthru
        _
    $region28: #{scn2_layer_forward.1} parent=5 // pred_fallthru
      _
    %p361 = scmp.le.s32.totalorder 2, %s8
    // Predicated region
    $region41: #{scn2_layer_forward.1} parent=5 // pred_check
      %p362 = pneg %p361
    $region42: #{scn2_layer_forward.1} parent=5 // pred_check_branch
      %364 = sbr.rel (%p362) target = $region44
    $region43: #{scn2_layer_forward.1} parent=5 // pred_region
      %s365 = ssub.s32 %s8, 2
      // Predicated region
      $region45: #{scn2_layer_forward.1} parent=43 // pred_check
        %p366 = pneg %p114
      $region46: #{scn2_layer_forward.1} parent=43 // pred_check_branch
        %368 = sbr.rel (%p366) target = $region48
      $region47: #{scn2_layer_forward.1} parent=43 // pred_region
        %s369 = smul.u32 4, %s22
        %p370 = scmp.lt.s32.totalorder %s21, 2
        %s371 = scalar_select %p370, %s21, 2
        %p372 = scmp.lt.s32.totalorder %s369, 3
        %s373 = scalar_select %p372, %s369, 3
        %s374 = smul.addr %s371, 4
        %s375 = sadd.s32 %s373, %s374
        %s376 = smul.addr %s375, 8
        %s377 = scalar_lea.vmem %s2, %s376
      $region48: #{scn2_layer_forward.1} parent=43 // pred_fallthru
        _
    $region44: #{scn2_layer_forward.1} parent=5 // pred_fallthru
      _
  $region6: #{scn2_layer_forward.1} parent=0 // loop_footer
    %s12 = sadd.s32 1, %s8
  $region7: #{scn2_layer_forward.1} parent=0 // loop_footer_branch
    %7 = sbr.rel target = $region3
  $region8: #{scn2_layer_forward.1} parent=0 // loop_exit
    _

</llo_original>
